<compile_context>
chip_gen: v6e
topology: v6e:2x2x1
jax: 0.10.0
libtpu: 0.0.40
codegen_flags: <defaults>
</compile_context>

<pallas_src>
import jax
import jax.numpy as jnp
import numpy as np
from jax import lax
from jax.experimental import pallas as pl
from jax.experimental.pallas import tpu as pltpu

T, N, C, H, W = 4, 2, 8, 16, 16        # inplanes == planes == 8 (no downsample path)
WC = W * C                             # 128: lane-dense last dim
MROWS = T * H                          # 64: batched matmul M per batch element
V_TH = 1.0                             # IF neuron threshold
assert H & (H - 1) == 0, "H must be a power of two (boundary mask uses bitwise_and)"


def basic_block_kernel(x_ref, w1_ref, b1_ref, w2_ref, b2_ref, out_ref):
    # x_ref/out_ref: [T, H, WC] f32 (one batch element; grid over N)
    # w*_ref: [3*WC, WC] bf16 block-Toeplitz (kh-stacked along K, BN scale folded in)
    # b*_ref: [1, WC]  f32 per-channel BN bias (tiled over W in the wrapper)

    x_all = x_ref[...]                               # [T, H, WC] f32 (also the identity)
    x2 = x_all.reshape(MROWS, WC)                    # [64, 128]

    # Per-image boundary masks for the +-1 (kh) row shifts.  Rows are flattened as
    # r = t*H + h, so a global sublane roll crosses image boundaries exactly at the
    # rows we must zero anyway (SAME padding at the H edges).
    row = lax.broadcasted_iota(jnp.int32, (MROWS, WC), 0)
    h_in = jnp.bitwise_and(row, H - 1)               # == row % H (H is a power of two)
    not_top = h_in != 0
    not_bot = h_in != H - 1

    def conv3x3(a, w_ref, b_ref):
        # a: [MROWS, WC] f32 activation rows.  One fused K=3*WC matmul:
        #   out[r] = [a[r-1] | a[r] | a[r+1]] @ [W_kh0; W_kh1; W_kh2]
        # with the shifted rows zeroed at each image's top/bottom boundary.
        a_up = jnp.where(not_top, pltpu.roll(a, 1, axis=0), 0.0)          # row r -> a[r-1]
        a_dn = jnp.where(not_bot, pltpu.roll(a, MROWS - 1, axis=0), 0.0)  # row r -> a[r+1]
        opnd = jnp.concatenate([a_up, a, a_dn], axis=-1).astype(jnp.bfloat16)  # [64, 384]
        acc = jnp.dot(opnd, w_ref[...], preferred_element_type=jnp.float32)    # [64, 128] f32
        return acc + b_ref[...]                       # bias broadcast once per conv

    def if_scan(h_all):
        # IF neuron: integrate -> fire (v >= V_TH) -> hard reset to 0.
        # Only this scan is sequential in t; membrane carried in registers.
        v = jnp.zeros((H, WC), jnp.float32)
        spikes = []
        for t in range(T):                            # T is a small static constant
            v = v + h_all[t]
            fire = v >= V_TH
            spikes.append(fire.astype(jnp.float32))
            v = jnp.where(fire, 0.0, v)
        return jnp.stack(spikes, axis=0)              # [T, H, WC]

    h1 = conv3x3(x2, w1_ref, b1_ref).reshape(T, H, WC)           # conv1 + bn1, all T at once
    spk1 = if_scan(h1)                                           # sn1
    h2 = conv3x3(spk1.reshape(MROWS, WC), w2_ref, b2_ref)        # conv2 + bn2, all T at once
    spk2 = if_scan(h2.reshape(T, H, WC))                         # sn2
    out_ref[...] = spk2 + x_all                                  # sew 'ADD': out + identity


def _block_toeplitz(w, scale):
    """w: [3,3,Cin,Cout] HWIO conv weight, scale: [Cout] BN scale.

    Returns a [3*W*Cin, W*Cout] bf16 matrix, kh-stacked along K, such that
    [a_up | a | a_dn] @ M equals the SAME-padded 3x3 conv (BN scale folded in),
    where activation lanes are laid out as [w*Cin + ci].
    """
    w = (w * scale[None, None, None, :]).astype(jnp.float32)
    cin, cout = w.shape[2], w.shape[3]
    # sel[kw, wi, wo] = 1 iff wi == wo + kw - 1  (SAME padding along W baked in)
    kw = np.arange(3)[:, None, None]
    wi = np.arange(W)[None, :, None]
    wo = np.arange(W)[None, None, :]
    sel = jnp.asarray((wi == wo + kw - 1).astype(np.float32))
    # m[kh, wi, ci, wo, co] = sum_kw sel[kw, wi, wo] * w[kh, kw, ci, co]
    m = jnp.einsum('kio,hkab->hiaob', sel, w)
    return m.reshape(3 * W * cin, W * cout).astype(jnp.bfloat16)


@jax.jit
def basic_block_forward(x, w1, scale1, bias1, w2, scale2, bias2):
    # x: [T, N, H, W, C] float32 (channels-last per timestep).
    # Lay out as [N, T, H, W*C]: lane-dense (last dim 128) and one contiguous DMA per n.
    xn = jnp.transpose(x, (1, 0, 2, 3, 4)).reshape(N, T, H, WC)
    w1t = _block_toeplitz(w1, scale1)                 # [384, 128] bf16, BN scale folded
    w2t = _block_toeplitz(w2, scale2)
    b1 = jnp.tile(bias1, W).reshape(1, WC).astype(jnp.float32)   # lane layout is [w*C + c]
    b2 = jnp.tile(bias2, W).reshape(1, WC).astype(jnp.float32)

    out = pl.pallas_call(
        basic_block_kernel,
        out_shape=jax.ShapeDtypeStruct((N, T, H, WC), jnp.float32),
        grid=(N,),
        in_specs=[
            pl.BlockSpec((None, T, H, WC), lambda n: (n, 0, 0, 0)),
            pl.BlockSpec((3 * WC, WC), lambda n: (0, 0)),
            pl.BlockSpec((1, WC), lambda n: (0, 0)),
            pl.BlockSpec((3 * WC, WC), lambda n: (0, 0)),
            pl.BlockSpec((1, WC), lambda n: (0, 0)),
        ],
        out_specs=pl.BlockSpec((None, T, H, WC), lambda n: (n, 0, 0, 0)),
        compiler_params=pltpu.CompilerParams(
            dimension_semantics=("parallel",)),        # M-split across TCs on v7x
    )(xn, w1t, b1, w2t, b2)
    return jnp.transpose(out.reshape(N, T, H, W, C), (1, 0, 2, 3, 4))


def reference_forward(x, w1, scale1, bias1, w2, scale2, bias2):
    """Pure-JAX reference with the same bf16 operand rounding (f32 accumulation)."""
    dn = ('NHWC', 'HWIO', 'NHWC')

    def q(a):  # match the kernel's bf16 matmul-operand rounding
        return a.astype(jnp.bfloat16).astype(jnp.float32)

    w1q = q(w1 * scale1[None, None, None, :])
    w2q = q(w2 * scale2[None, None, None, :])
    v1 = jnp.zeros((N, H, W, C), jnp.float32)
    v2 = jnp.zeros((N, H, W, C), jnp.float32)
    outs = []
    for t in range(T):
        xt = x[t]
        h1 = lax.conv_general_dilated(q(xt), w1q, (1, 1), 'SAME', dimension_numbers=dn) + bias1
        v1 = v1 + h1
        f1 = v1 >= V_TH
        s1 = f1.astype(jnp.float32)
        v1 = jnp.where(f1, 0.0, v1)
        h2 = lax.conv_general_dilated(s1, w2q, (1, 1), 'SAME', dimension_numbers=dn) + bias2
        v2 = v2 + h2
        f2 = v2 >= V_TH
        s2 = f2.astype(jnp.float32)
        v2 = jnp.where(f2, 0.0, v2)
        outs.append(s2 + xt)                          # identity add in full f32
    return jnp.stack(outs)


if __name__ == "__main__":
    key = jax.random.PRNGKey(0)
    ks = jax.random.split(key, 7)
    x = jax.random.normal(ks[0], (T, N, H, W, C), jnp.float32)
    fan_in = 9 * C
    w1 = jax.random.normal(ks[1], (3, 3, C, C), jnp.float32) / np.sqrt(fan_in)
    w2 = jax.random.normal(ks[2], (3, 3, C, C), jnp.float32) / np.sqrt(fan_in)
    scale1 = 1.0 + 0.2 * jax.random.normal(ks[3], (C,), jnp.float32)
    bias1 = 0.1 * jax.random.normal(ks[4], (C,), jnp.float32)
    scale2 = 1.0 + 0.2 * jax.random.normal(ks[5], (C,), jnp.float32)
    bias2 = 0.1 * jax.random.normal(ks[6], (C,), jnp.float32)

    out = basic_block_forward(x, w1, scale1, bias1, w2, scale2, bias2)
    out = jax.block_until_ready(out)

    ref = reference_forward(x, w1, scale1, bias1, w2, scale2, bias2)
    out_np, ref_np = np.asarray(out), np.asarray(ref)
    assert out_np.shape == (T, N, H, W, C)
    assert np.all(np.isfinite(out_np))
    # allow a tiny fraction of spike flips caused by float accumulation-order deltas
    frac_bad = float(np.mean(np.abs(out_np - ref_np) > 1e-3))
    assert frac_bad < 5e-3, f"mismatch fraction too high: {frac_bad}"
    print("KERNEL_OK")
</pallas_src>

<mosaic_0001>
module attributes {stable_mosaic.version = 11 : i64} {
  func.func @basic_block_kernel(%arg0: i32, %arg1: memref<1x4x16x128xf32, #tpu.memory_space<vmem>>, %arg2: memref<384x128xbf16, #tpu.memory_space<vmem>>, %arg3: memref<1x128xf32, #tpu.memory_space<vmem>>, %arg4: memref<384x128xbf16, #tpu.memory_space<vmem>>, %arg5: memref<1x128xf32, #tpu.memory_space<vmem>>, %arg6: memref<1x4x16x128xf32, #tpu.memory_space<vmem>>) attributes {dimension_semantics = [#tpu.dimension_semantics<parallel>], iteration_bounds = array<i64: 2>, scalar_prefetch = 0 : i64, scratch_operands = 0 : i64, tpu.core_type = #tpu.core_type<tc>, window_params = [{transform_indices = @transform_0, window_bounds = array<i64: 1, 4, 16, 128>}, {pipeline_mode = #tpu.pipeline_mode<synchronous>, transform_indices = @transform_1, window_bounds = array<i64: 384, 128>}, {pipeline_mode = #tpu.pipeline_mode<synchronous>, transform_indices = @transform_2, window_bounds = array<i64: 1, 128>}, {pipeline_mode = #tpu.pipeline_mode<synchronous>, transform_indices = @transform_3, window_bounds = array<i64: 384, 128>}, {pipeline_mode = #tpu.pipeline_mode<synchronous>, transform_indices = @transform_4, window_bounds = array<i64: 1, 128>}, {transform_indices = @transform_5, window_bounds = array<i64: 1, 4, 16, 128>}]} {
    %c0 = arith.constant 0 : index
    %c0_0 = arith.constant 0 : index
    %c0_1 = arith.constant 0 : index
    %c0_2 = arith.constant 0 : index
    %0 = vector.load %arg1[%c0, %c0_0, %c0_1, %c0_2] : memref<1x4x16x128xf32, #tpu.memory_space<vmem>>, vector<1x4x16x128xf32>
    %1 = vector.shape_cast %0 : vector<1x4x16x128xf32> to vector<4x16x128xf32>
    %2 = vector.shape_cast %1 : vector<4x16x128xf32> to vector<64x128xf32>
    %3 = tpu.iota {dimensions = array<i32: 0>} : vector<64x128xi32>
    %c15_i32 = arith.constant 15 : i32
    %4 = vector.broadcast %c15_i32 : i32 to vector<64x128xi32>
    %5 = arith.andi %3, %4 : vector<64x128xi32>
    %c0_i32 = arith.constant 0 : i32
    %6 = vector.broadcast %c0_i32 : i32 to vector<64x128xi32>
    %7 = arith.cmpi ne, %5, %6 : vector<64x128xi32>
    %c15_i32_3 = arith.constant 15 : i32
    %8 = vector.broadcast %c15_i32_3 : i32 to vector<64x128xi32>
    %9 = arith.cmpi ne, %5, %8 : vector<64x128xi32>
    %c1_i32 = arith.constant 1 : i32
    %10 = tpu.dynamic_rotate %2 by %c1_i32 dim 0 : vector<64x128xf32>, i32 -> vector<64x128xf32>
    %cst = arith.constant 0.000000e+00 : f32
    %11 = vector.broadcast %cst : f32 to vector<64x128xf32>
    %12 = arith.select %7, %10, %11 : vector<64x128xi1>, vector<64x128xf32>
    %c63_i32 = arith.constant 63 : i32
    %13 = tpu.dynamic_rotate %2 by %c63_i32 dim 0 : vector<64x128xf32>, i32 -> vector<64x128xf32>
    %cst_4 = arith.constant 0.000000e+00 : f32
    %14 = vector.broadcast %cst_4 : f32 to vector<64x128xf32>
    %15 = arith.select %9, %13, %14 : vector<64x128xi1>, vector<64x128xf32>
    %16 = tpu.concatenate %12, %2, %15 in 1 : vector<64x128xf32>, vector<64x128xf32>, vector<64x128xf32> -> vector<64x384xf32>
    %17 = arith.truncf %16 : vector<64x384xf32> to vector<64x384xbf16>
    %c0_5 = arith.constant 0 : index
    %c0_6 = arith.constant 0 : index
    %18 = vector.load %arg2[%c0_5, %c0_6] : memref<384x128xbf16, #tpu.memory_space<vmem>>, vector<384x128xbf16>
    %cst_7 = arith.constant dense<0.000000e+00> : vector<64x128xf32>
    %19 = tpu.matmul %17, %18, %cst_7 {dimension_numbers = #tpu.dot_dimension_numbers<[1], [0], [0], [1], [0, 0, 1, 1], [], []>} : vector<64x384xbf16>, vector<384x128xbf16>, vector<64x128xf32> -> vector<64x128xf32>
    %c0_8 = arith.constant 0 : index
    %c0_9 = arith.constant 0 : index
    %20 = vector.load %arg3[%c0_8, %c0_9] : memref<1x128xf32, #tpu.memory_space<vmem>>, vector<1x128xf32>
    %21 = vector.broadcast %20 : vector<1x128xf32> to vector<64x128xf32>
    %22 = arith.addf %19, %21 : vector<64x128xf32>
    %23 = vector.shape_cast %22 : vector<64x128xf32> to vector<4x16x128xf32>
    %cst_10 = arith.constant 0.000000e+00 : f32
    %24 = vector.broadcast %cst_10 : f32 to vector<16x128xf32>
    %25 = vector.extract_strided_slice %23 {offsets = [0, 0, 0], sizes = [1, 16, 128], strides = [1, 1, 1]} : vector<4x16x128xf32> to vector<1x16x128xf32>
    %26 = vector.shape_cast %25 : vector<1x16x128xf32> to vector<16x128xf32>
    %27 = arith.addf %24, %26 : vector<16x128xf32>
    %cst_11 = arith.constant 1.000000e+00 : f32
    %28 = vector.broadcast %cst_11 : f32 to vector<16x128xf32>
    %29 = arith.cmpf oge, %27, %28 : vector<16x128xf32>
    %30 = arith.extui %29 : vector<16x128xi1> to vector<16x128xi32>
    %31 = arith.sitofp %30 : vector<16x128xi32> to vector<16x128xf32>
    %cst_12 = arith.constant 0.000000e+00 : f32
    %32 = vector.broadcast %cst_12 : f32 to vector<16x128xf32>
    %33 = arith.select %29, %32, %27 : vector<16x128xi1>, vector<16x128xf32>
    %34 = vector.extract_strided_slice %23 {offsets = [1, 0, 0], sizes = [1, 16, 128], strides = [1, 1, 1]} : vector<4x16x128xf32> to vector<1x16x128xf32>
    %35 = vector.shape_cast %34 : vector<1x16x128xf32> to vector<16x128xf32>
    %36 = arith.addf %33, %35 : vector<16x128xf32>
    %cst_13 = arith.constant 1.000000e+00 : f32
    %37 = vector.broadcast %cst_13 : f32 to vector<16x128xf32>
    %38 = arith.cmpf oge, %36, %37 : vector<16x128xf32>
    %39 = arith.extui %38 : vector<16x128xi1> to vector<16x128xi32>
    %40 = arith.sitofp %39 : vector<16x128xi32> to vector<16x128xf32>
    %cst_14 = arith.constant 0.000000e+00 : f32
    %41 = vector.broadcast %cst_14 : f32 to vector<16x128xf32>
    %42 = arith.select %38, %41, %36 : vector<16x128xi1>, vector<16x128xf32>
    %43 = vector.extract_strided_slice %23 {offsets = [2, 0, 0], sizes = [1, 16, 128], strides = [1, 1, 1]} : vector<4x16x128xf32> to vector<1x16x128xf32>
    %44 = vector.shape_cast %43 : vector<1x16x128xf32> to vector<16x128xf32>
    %45 = arith.addf %42, %44 : vector<16x128xf32>
    %cst_15 = arith.constant 1.000000e+00 : f32
    %46 = vector.broadcast %cst_15 : f32 to vector<16x128xf32>
    %47 = arith.cmpf oge, %45, %46 : vector<16x128xf32>
    %48 = arith.extui %47 : vector<16x128xi1> to vector<16x128xi32>
    %49 = arith.sitofp %48 : vector<16x128xi32> to vector<16x128xf32>
    %cst_16 = arith.constant 0.000000e+00 : f32
    %50 = vector.broadcast %cst_16 : f32 to vector<16x128xf32>
    %51 = arith.select %47, %50, %45 : vector<16x128xi1>, vector<16x128xf32>
    %52 = vector.extract_strided_slice %23 {offsets = [3, 0, 0], sizes = [1, 16, 128], strides = [1, 1, 1]} : vector<4x16x128xf32> to vector<1x16x128xf32>
    %53 = vector.shape_cast %52 : vector<1x16x128xf32> to vector<16x128xf32>
    %54 = arith.addf %51, %53 : vector<16x128xf32>
    %cst_17 = arith.constant 1.000000e+00 : f32
    %55 = vector.broadcast %cst_17 : f32 to vector<16x128xf32>
    %56 = arith.cmpf oge, %54, %55 : vector<16x128xf32>
    %57 = arith.extui %56 : vector<16x128xi1> to vector<16x128xi32>
    %58 = arith.sitofp %57 : vector<16x128xi32> to vector<16x128xf32>
    %59 = vector.shape_cast %31 : vector<16x128xf32> to vector<1x16x128xf32>
    %60 = vector.shape_cast %40 : vector<16x128xf32> to vector<1x16x128xf32>
    %61 = vector.shape_cast %49 : vector<16x128xf32> to vector<1x16x128xf32>
    %62 = vector.shape_cast %58 : vector<16x128xf32> to vector<1x16x128xf32>
    %63 = tpu.concatenate %59, %60, %61, %62 in 0 : vector<1x16x128xf32>, vector<1x16x128xf32>, vector<1x16x128xf32>, vector<1x16x128xf32> -> vector<4x16x128xf32>
    %64 = vector.shape_cast %63 : vector<4x16x128xf32> to vector<64x128xf32>
    %c1_i32_18 = arith.constant 1 : i32
    %65 = tpu.dynamic_rotate %64 by %c1_i32_18 dim 0 : vector<64x128xf32>, i32 -> vector<64x128xf32>
    %cst_19 = arith.constant 0.000000e+00 : f32
    %66 = vector.broadcast %cst_19 : f32 to vector<64x128xf32>
    %67 = arith.select %7, %65, %66 : vector<64x128xi1>, vector<64x128xf32>
    %c63_i32_20 = arith.constant 63 : i32
    %68 = tpu.dynamic_rotate %64 by %c63_i32_20 dim 0 : vector<64x128xf32>, i32 -> vector<64x128xf32>
    %cst_21 = arith.constant 0.000000e+00 : f32
    %69 = vector.broadcast %cst_21 : f32 to vector<64x128xf32>
    %70 = arith.select %9, %68, %69 : vector<64x128xi1>, vector<64x128xf32>
    %71 = tpu.concatenate %67, %64, %70 in 1 : vector<64x128xf32>, vector<64x128xf32>, vector<64x128xf32> -> vector<64x384xf32>
    %72 = arith.truncf %71 : vector<64x384xf32> to vector<64x384xbf16>
    %c0_22 = arith.constant 0 : index
    %c0_23 = arith.constant 0 : index
    %73 = vector.load %arg4[%c0_22, %c0_23] : memref<384x128xbf16, #tpu.memory_space<vmem>>, vector<384x128xbf16>
    %cst_24 = arith.constant dense<0.000000e+00> : vector<64x128xf32>
    %74 = tpu.matmul %72, %73, %cst_24 {dimension_numbers = #tpu.dot_dimension_numbers<[1], [0], [0], [1], [0, 0, 1, 1], [], []>} : vector<64x384xbf16>, vector<384x128xbf16>, vector<64x128xf32> -> vector<64x128xf32>
    %c0_25 = arith.constant 0 : index
    %c0_26 = arith.constant 0 : index
    %75 = vector.load %arg5[%c0_25, %c0_26] : memref<1x128xf32, #tpu.memory_space<vmem>>, vector<1x128xf32>
    %76 = vector.broadcast %75 : vector<1x128xf32> to vector<64x128xf32>
    %77 = arith.addf %74, %76 : vector<64x128xf32>
    %78 = vector.shape_cast %77 : vector<64x128xf32> to vector<4x16x128xf32>
    %cst_27 = arith.constant 0.000000e+00 : f32
    %79 = vector.broadcast %cst_27 : f32 to vector<16x128xf32>
    %80 = vector.extract_strided_slice %78 {offsets = [0, 0, 0], sizes = [1, 16, 128], strides = [1, 1, 1]} : vector<4x16x128xf32> to vector<1x16x128xf32>
    %81 = vector.shape_cast %80 : vector<1x16x128xf32> to vector<16x128xf32>
    %82 = arith.addf %79, %81 : vector<16x128xf32>
    %cst_28 = arith.constant 1.000000e+00 : f32
    %83 = vector.broadcast %cst_28 : f32 to vector<16x128xf32>
    %84 = arith.cmpf oge, %82, %83 : vector<16x128xf32>
    %85 = arith.extui %84 : vector<16x128xi1> to vector<16x128xi32>
    %86 = arith.sitofp %85 : vector<16x128xi32> to vector<16x128xf32>
    %cst_29 = arith.constant 0.000000e+00 : f32
    %87 = vector.broadcast %cst_29 : f32 to vector<16x128xf32>
    %88 = arith.select %84, %87, %82 : vector<16x128xi1>, vector<16x128xf32>
    %89 = vector.extract_strided_slice %78 {offsets = [1, 0, 0], sizes = [1, 16, 128], strides = [1, 1, 1]} : vector<4x16x128xf32> to vector<1x16x128xf32>
    %90 = vector.shape_cast %89 : vector<1x16x128xf32> to vector<16x128xf32>
    %91 = arith.addf %88, %90 : vector<16x128xf32>
    %cst_30 = arith.constant 1.000000e+00 : f32
    %92 = vector.broadcast %cst_30 : f32 to vector<16x128xf32>
    %93 = arith.cmpf oge, %91, %92 : vector<16x128xf32>
    %94 = arith.extui %93 : vector<16x128xi1> to vector<16x128xi32>
    %95 = arith.sitofp %94 : vector<16x128xi32> to vector<16x128xf32>
    %cst_31 = arith.constant 0.000000e+00 : f32
    %96 = vector.broadcast %cst_31 : f32 to vector<16x128xf32>
    %97 = arith.select %93, %96, %91 : vector<16x128xi1>, vector<16x128xf32>
    %98 = vector.extract_strided_slice %78 {offsets = [2, 0, 0], sizes = [1, 16, 128], strides = [1, 1, 1]} : vector<4x16x128xf32> to vector<1x16x128xf32>
    %99 = vector.shape_cast %98 : vector<1x16x128xf32> to vector<16x128xf32>
    %100 = arith.addf %97, %99 : vector<16x128xf32>
    %cst_32 = arith.constant 1.000000e+00 : f32
    %101 = vector.broadcast %cst_32 : f32 to vector<16x128xf32>
    %102 = arith.cmpf oge, %100, %101 : vector<16x128xf32>
    %103 = arith.extui %102 : vector<16x128xi1> to vector<16x128xi32>
    %104 = arith.sitofp %103 : vector<16x128xi32> to vector<16x128xf32>
    %cst_33 = arith.constant 0.000000e+00 : f32
    %105 = vector.broadcast %cst_33 : f32 to vector<16x128xf32>
    %106 = arith.select %102, %105, %100 : vector<16x128xi1>, vector<16x128xf32>
    %107 = vector.extract_strided_slice %78 {offsets = [3, 0, 0], sizes = [1, 16, 128], strides = [1, 1, 1]} : vector<4x16x128xf32> to vector<1x16x128xf32>
    %108 = vector.shape_cast %107 : vector<1x16x128xf32> to vector<16x128xf32>
    %109 = arith.addf %106, %108 : vector<16x128xf32>
    %cst_34 = arith.constant 1.000000e+00 : f32
    %110 = vector.broadcast %cst_34 : f32 to vector<16x128xf32>
    %111 = arith.cmpf oge, %109, %110 : vector<16x128xf32>
    %112 = arith.extui %111 : vector<16x128xi1> to vector<16x128xi32>
    %113 = arith.sitofp %112 : vector<16x128xi32> to vector<16x128xf32>
    %114 = vector.shape_cast %86 : vector<16x128xf32> to vector<1x16x128xf32>
    %115 = vector.shape_cast %95 : vector<16x128xf32> to vector<1x16x128xf32>
    %116 = vector.shape_cast %104 : vector<16x128xf32> to vector<1x16x128xf32>
    %117 = vector.shape_cast %113 : vector<16x128xf32> to vector<1x16x128xf32>
    %118 = tpu.concatenate %114, %115, %116, %117 in 0 : vector<1x16x128xf32>, vector<1x16x128xf32>, vector<1x16x128xf32>, vector<1x16x128xf32> -> vector<4x16x128xf32>
    %119 = arith.addf %118, %1 : vector<4x16x128xf32>
    %c0_35 = arith.constant 0 : index
    %c0_36 = arith.constant 0 : index
    %c0_37 = arith.constant 0 : index
    %c0_38 = arith.constant 0 : index
    %120 = vector.load %arg6[%c0_35, %c0_36, %c0_37, %c0_38] : memref<1x4x16x128xf32, #tpu.memory_space<vmem>>, vector<1x4x16x128xf32>
    %121 = vector.shape_cast %120 : vector<1x4x16x128xf32> to vector<4x16x128xf32>
    %122 = vector.shape_cast %119 : vector<4x16x128xf32> to vector<1x4x16x128xf32>
    tpu.vector_store %arg6[%c0_35, %c0_36, %c0_37, %c0_38], %122 {strides = array<i32>} : memref<1x4x16x128xf32, #tpu.memory_space<vmem>>, vector<1x4x16x128xf32>,
    return
  }
  func.func @transform_0(%arg0: i32) -> (i32, i32, i32, i32) {
    %c0_i32 = arith.constant 0 : i32
    %c0_i32_0 = arith.constant 0 : i32
    %c0_i32_1 = arith.constant 0 : i32
    %c0_i32_2 = arith.constant 0 : i32
    return %arg0, %c0_i32, %c0_i32_0, %c0_i32_1 : i32, i32, i32, i32
  }
  func.func @transform_1(%arg0: i32) -> (i32, i32) {
    %c0_i32 = arith.constant 0 : i32
    %c0_i32_0 = arith.constant 0 : i32
    %c0_i32_1 = arith.constant 0 : i32
    return %c0_i32, %c0_i32_0 : i32, i32
  }
  func.func @transform_2(%arg0: i32) -> (i32, i32) {
    %c0_i32 = arith.constant 0 : i32
    %c0_i32_0 = arith.constant 0 : i32
    %c0_i32_1 = arith.constant 0 : i32
    return %c0_i32, %c0_i32_0 : i32, i32
  }
  func.func @transform_3(%arg0: i32) -> (i32, i32) {
    %c0_i32 = arith.constant 0 : i32
    %c0_i32_0 = arith.constant 0 : i32
    %c0_i32_1 = arith.constant 0 : i32
    return %c0_i32, %c0_i32_0 : i32, i32
  }
  func.func @transform_4(%arg0: i32) -> (i32, i32) {
    %c0_i32 = arith.constant 0 : i32
    %c0_i32_0 = arith.constant 0 : i32
    %c0_i32_1 = arith.constant 0 : i32
    return %c0_i32, %c0_i32_0 : i32, i32
  }
  func.func @transform_5(%arg0: i32) -> (i32, i32, i32, i32) {
    %c0_i32 = arith.constant 0 : i32
    %c0_i32_0 = arith.constant 0 : i32
    %c0_i32_1 = arith.constant 0 : i32
    %c0_i32_2 = arith.constant 0 : i32
    return %arg0, %c0_i32, %c0_i32_0, %c0_i32_1 : i32, i32, i32, i32
  }
}

</mosaic_0001>

<llo_original>
// kernel: tile.13
$region0: #{tile.13}
  #allocation0 [shape = 's32[1]{0}', space=sflag, size = 0x4, scoped, tag = 'scoped memory for tile.13']
  %s0 = inlined_call_operand.vmem [shape: f32[8], index: 0, kind: input, shape index: {}]
  %s1 = inlined_call_operand.vmem [shape: f32[16,8], index: 1, kind: output, shape index: {}]
  // Predicated region
  $region2: #{tile.13} parent=0 // pred_check
    _
  $region3: #{tile.13} parent=0 // pred_check_branch
    %3 = sbr.rel (0) target = $region5
  $region4: #{tile.13} parent=0 // pred_region
    _
  $region5: #{tile.13} parent=0 // pred_fallthru
    _
  %v4 = vld [vmem:[%s0] ss:$0 sm:$0xff]
  %5 = vst [vmem:[%s1] sm:$0xff] %v4
  %s6 = scalar_lea.vmem %s1, 8
  %7 = vst [vmem:[%s6] sm:$0xff] %v4

// kernel: tile.14
$region0: #{tile.14}
  %s0 = inlined_call_operand.vmem [shape: f32[16,8], index: 0, kind: input, shape index: {}]
  %s1 = inlined_call_operand.vmem [shape: f32[1,128], index: 1, kind: output, shape index: {}]
  $region1: #{tile.14} parent=0
    #allocation0 [shape = 'u8[4096]{0}', space=vmem, size = 0x1000, scoped, tag = 'scoped mem for output reshape']
    %v2 = vld [vmem:[%s0] sm:$0x1]
    %vm3 = vcmask 64512
    %4 = vst.msk [vmem:[#allocation0] sm:$0x1] %vm3, %v2
    %s5 = scalar_lea.vmem %s0, 15
    %v6 = vld [vmem:[%s5] sm:$0x1]
    %7 = vrot.lane.b32.xlu0 %v6, 120
    %v8 = vpop.permute.xlu0 %7
    %vm9 = vcmask 1048512
    %10 = vst.msk [vmem:[#allocation0] sm:$0x1] %vm9, %v8
    %s11 = scalar_lea.vmem %s0, 14
    %v12 = vld [vmem:[%s11] sm:$0x1]
    %13 = vrot.lane.b32.xlu0 %v12, 112
    %v14 = vpop.permute.xlu0 %13
    %vm15 = vcmask 982912
    %16 = vst.msk [vmem:[#allocation0] sm:$0x1] %vm15, %v14
    %s17 = scalar_lea.vmem %s0, 13
    %v18 = vld [vmem:[%s17] sm:$0x1]
    %19 = vrot.lane.b32.xlu0 %v18, 104
    %v20 = vpop.permute.xlu0 %19
    %vm21 = vcmask 917312
    %22 = vst.msk [vmem:[#allocation0] sm:$0x1] %vm21, %v20
    %s23 = scalar_lea.vmem %s0, 12
    %v24 = vld [vmem:[%s23] sm:$0x1]
    %25 = vrot.lane.b32.xlu0 %v24, 96
    %v26 = vpop.permute.xlu0 %25
    %vm27 = vcmask 851712
    %28 = vst.msk [vmem:[#allocation0] sm:$0x1] %vm27, %v26
    %s29 = scalar_lea.vmem %s0, 11
    %v30 = vld [vmem:[%s29] sm:$0x1]
    %31 = vrot.lane.b32.xlu0 %v30, 88
    %v32 = vpop.permute.xlu0 %31
    %vm33 = vcmask 786112
    %34 = vst.msk [vmem:[#allocation0] sm:$0x1] %vm33, %v32
    %s35 = scalar_lea.vmem %s0, 10
    %v36 = vld [vmem:[%s35] sm:$0x1]
    %37 = vrot.lane.b32.xlu0 %v36, 80
    %v38 = vpop.permute.xlu0 %37
    %vm39 = vcmask 720512
    %40 = vst.msk [vmem:[#allocation0] sm:$0x1] %vm39, %v38
    %s41 = scalar_lea.vmem %s0, 9
    %v42 = vld [vmem:[%s41] sm:$0x1]
    %43 = vrot.lane.b32.xlu0 %v42, 72
    %v44 = vpop.permute.xlu0 %43
    %vm45 = vcmask 654912
    %46 = vst.msk [vmem:[#allocation0] sm:$0x1] %vm45, %v44
    %s47 = scalar_lea.vmem %s0, 8
    %v48 = vld [vmem:[%s47] sm:$0x1]
    %49 = vrot.lane.b32.xlu0 %v48, 64
    %v50 = vpop.permute.xlu0 %49
    %vm51 = vcmask 589312
    %52 = vst.msk [vmem:[#allocation0] sm:$0x1] %vm51, %v50
    %s53 = scalar_lea.vmem %s0, 7
    %v54 = vld [vmem:[%s53] sm:$0x1]
    %55 = vrot.lane.b32.xlu0 %v54, 56
    %v56 = vpop.permute.xlu0 %55
    %vm57 = vcmask 523712
    %58 = vst.msk [vmem:[#allocation0] sm:$0x1] %vm57, %v56
    %s59 = scalar_lea.vmem %s0, 6
    %v60 = vld [vmem:[%s59] sm:$0x1]
    %61 = vrot.lane.b32.xlu0 %v60, 48
    %v62 = vpop.permute.xlu0 %61
    %vm63 = vcmask 458112
    %64 = vst.msk [vmem:[#allocation0] sm:$0x1] %vm63, %v62
    %s65 = scalar_lea.vmem %s0, 5
    %v66 = vld [vmem:[%s65] sm:$0x1]
    %67 = vrot.lane.b32.xlu0 %v66, 40
    %v68 = vpop.permute.xlu0 %67
    %vm69 = vcmask 392512
    %70 = vst.msk [vmem:[#allocation0] sm:$0x1] %vm69, %v68
    %s71 = scalar_lea.vmem %s0, 4
    %v72 = vld [vmem:[%s71] sm:$0x1]
    %73 = vrot.lane.b32.xlu0 %v72, 32
    %v74 = vpop.permute.xlu0 %73
    %vm75 = vcmask 326912
    %76 = vst.msk [vmem:[#allocation0] sm:$0x1] %vm75, %v74
    %s77 = scalar_lea.vmem %s0, 3
    %v78 = vld [vmem:[%s77] sm:$0x1]
    %79 = vrot.lane.b32.xlu0 %v78, 24
    %v80 = vpop.permute.xlu0 %79
    %vm81 = vcmask 261312
    %82 = vst.msk [vmem:[#allocation0] sm:$0x1] %vm81, %v80
    %s83 = scalar_lea.vmem %s0, 2
    %v84 = vld [vmem:[%s83] sm:$0x1]
    %85 = vrot.lane.b32.xlu0 %v84, 16
    %v86 = vpop.permute.xlu0 %85
    %vm87 = vcmask 195712
    %88 = vst.msk [vmem:[#allocation0] sm:$0x1] %vm87, %v86
    %s89 = scalar_lea.vmem %s0, 1
    %v90 = vld [vmem:[%s89] sm:$0x1]
    %91 = vrot.lane.b32.xlu0 %v90, 8
    %v92 = vpop.permute.xlu0 %91
    %vm93 = vcmask 130112
    %94 = vst.msk [vmem:[#allocation0] sm:$0x1] %vm93, %v92
    %s96 = sshll.u32 1, 1
    %s97 = ssub.s32 %s96, 1
    %v99 = vld [vmem:[#allocation0] sm:%s97]
    %s100 = sshll.u32 1, 1
    %s101 = ssub.s32 %s100, 1
    %102 = vst [vmem:[%s1] sm:%s101] %v99

// kernel: basic_block_forward.1
$region0: #{basic_block_forward.1}
  #allocation0 [shape = 'u32[]', space=smem, size = 0x4, offset = 0x4, fixed_abs, tag = 'smem constant byte address 0x4 - core index']
  #allocation1 [shape = 'u32[144,128]{1,0:T(1,128)}', space=vmem, size = 0x12000, scoped, tag = 'internal scratch']
  %s0 = inlined_call_operand.vmem [shape: f32[2,4,16,128], index: 0, kind: input, shape index: {}]
  %s1 = inlined_call_operand.vmem [shape: bf16[384,128], index: 1, kind: input, shape index: {}]
  %s2 = inlined_call_operand.vmem [shape: f32[1,128], index: 2, kind: input, shape index: {}]
  %s3 = inlined_call_operand.vmem [shape: bf16[384,128], index: 3, kind: input, shape index: {}]
  %s4 = inlined_call_operand.vmem [shape: f32[1,128], index: 4, kind: input, shape index: {}]
  %s5 = inlined_call_operand.vmem [shape: f32[2,4,16,128], index: 5, kind: output, shape index: {}]
  %s6 = sld [smem:[#allocation0]]
  $region53: #{basic_block_forward.1} parent=0
    _
  %s8 = ssub.s32 1, %s6
  %s9 = scalar_select 0, %s8, %s6
  loop: start=0, step=1, limit=4
  $region2: #{basic_block_forward.1} parent=0 // loop_pre_header
    _
  $region3: #{basic_block_forward.1} parent=0 // loop_header
    %s11 = sphi 0, %s15
    %p12 = scmp.ge.s32.totalorder %s11, 4
    %s21 = sphi 0, %s23
    %s24 = sphi 0, %s21
    %s25 = sphi 0, %s24
    %s41 = sphi 0, %s25
    %s45 = sphi 0, %s45
    %s47 = sphi 0, %s45
    %s48 = sphi 0, %s47
    %s62 = sphi 0, %s48
    %s66 = sphi 0, %s66
    %s68 = sphi 0, %s66
    %s69 = sphi 0, %s68
    %s83 = sphi 0, %s69
    %s87 = sphi 0, %s87
    %s89 = sphi 0, %s87
    %s90 = sphi 0, %s89
    %s104 = sphi 0, %s90
    %s108 = sphi 0, %s108
    %s110 = sphi 0, %s108
    %s111 = sphi 0, %s110
    %s125 = sphi 0, %s111
    %s131 = sphi 0, %s133
    %s134 = sphi 0, %s131
    %s135 = sphi 0, %s134
    %s151 = sphi 0, %s135
  $region4: #{basic_block_forward.1} parent=0 // loop_header_branch
    %14 = sbr.rel (%p12) target = $region8
  $region5: #{basic_block_forward.1} parent=0 // loop_body
    %s16 = ssub.s32 %s11, 1
    %s17 = ssub.s32 %s11, 2
    %s18 = sadd.s32 %s11, 1
    %s19 = ssub.s32 %s11, %s18
    %p20 = scmp.eq.s32.totalorder %s19, 0
    %s22 = sadd.s32 %s21, 1
    %s23 = scalar_select %p20, %s21, %s22
    %p26 = pneg %p20
    %p27 = scmp.eq.s32.totalorder %s11, 1
    %p28 = por %p26, %p27
    %p29 = scmp.ne.s32.totalorder %s21, %s24
    %p30 = scmp.eq.s32.totalorder %s11, 0
    %p31 = por %p29, %p30
    %p32 = scmp.ne.s32.totalorder %s21, %s24
    %p33 = scmp.eq.s32.totalorder %s16, 1
    %p34 = por %p32, %p33
    %p35 = scmp.ne.s32.totalorder %s24, %s25
    %p36 = scmp.eq.s32.totalorder %s16, 0
    %p37 = por %p35, %p36
    %p38 = scmp.ne.s32.totalorder %s24, %s25
    %p39 = scmp.eq.s32.totalorder %s17, 1
    %p40 = por %p38, %p39
    %p42 = scmp.ne.s32.totalorder %s25, %s41
    %p43 = scmp.eq.s32.totalorder %s17, 0
    %p44 = por %p42, %p43
    %s46 = sadd.s32 %s45, 1
    %p49 = scmp.eq.s32.totalorder %s11, 1
    %p50 = scmp.ne.s32.totalorder %s45, %s47
    %p51 = scmp.eq.s32.totalorder %s11, 0
    %p52 = por %p50, %p51
    %p53 = scmp.ne.s32.totalorder %s45, %s47
    %p54 = scmp.eq.s32.totalorder %s16, 1
    %p55 = por %p53, %p54
    %p56 = scmp.ne.s32.totalorder %s47, %s48
    %p57 = scmp.eq.s32.totalorder %s16, 0
    %p58 = por %p56, %p57
    %p59 = scmp.ne.s32.totalorder %s47, %s48
    %p60 = scmp.eq.s32.totalorder %s17, 1
    %p61 = por %p59, %p60
    %p63 = scmp.ne.s32.totalorder %s48, %s62
    %p64 = scmp.eq.s32.totalorder %s17, 0
    %p65 = por %p63, %p64
    %s67 = sadd.s32 %s66, 1
    %p70 = scmp.eq.s32.totalorder %s11, 1
    %p71 = scmp.ne.s32.totalorder %s66, %s68
    %p72 = scmp.eq.s32.totalorder %s11, 0
    %p73 = por %p71, %p72
    %p74 = scmp.ne.s32.totalorder %s66, %s68
    %p75 = scmp.eq.s32.totalorder %s16, 1
    %p76 = por %p74, %p75
    %p77 = scmp.ne.s32.totalorder %s68, %s69
    %p78 = scmp.eq.s32.totalorder %s16, 0
    %p79 = por %p77, %p78
    %p80 = scmp.ne.s32.totalorder %s68, %s69
    %p81 = scmp.eq.s32.totalorder %s17, 1
    %p82 = por %p80, %p81
    %p84 = scmp.ne.s32.totalorder %s69, %s83
    %p85 = scmp.eq.s32.totalorder %s17, 0
    %p86 = por %p84, %p85
    %s88 = sadd.s32 %s87, 1
    %p91 = scmp.eq.s32.totalorder %s11, 1
    %p92 = scmp.ne.s32.totalorder %s87, %s89
    %p93 = scmp.eq.s32.totalorder %s11, 0
    %p94 = por %p92, %p93
    %p95 = scmp.ne.s32.totalorder %s87, %s89
    %p96 = scmp.eq.s32.totalorder %s16, 1
    %p97 = por %p95, %p96
    %p98 = scmp.ne.s32.totalorder %s89, %s90
    %p99 = scmp.eq.s32.totalorder %s16, 0
    %p100 = por %p98, %p99
    %p101 = scmp.ne.s32.totalorder %s89, %s90
    %p102 = scmp.eq.s32.totalorder %s17, 1
    %p103 = por %p101, %p102
    %p105 = scmp.ne.s32.totalorder %s90, %s104
    %p106 = scmp.eq.s32.totalorder %s17, 0
    %p107 = por %p105, %p106
    %s109 = sadd.s32 %s108, 1
    %p112 = scmp.eq.s32.totalorder %s11, 1
    %p113 = scmp.ne.s32.totalorder %s108, %s110
    %p114 = scmp.eq.s32.totalorder %s11, 0
    %p115 = por %p113, %p114
    %p116 = scmp.ne.s32.totalorder %s108, %s110
    %p117 = scmp.eq.s32.totalorder %s16, 1
    %p118 = por %p116, %p117
    %p119 = scmp.ne.s32.totalorder %s110, %s111
    %p120 = scmp.eq.s32.totalorder %s16, 0
    %p121 = por %p119, %p120
    %p122 = scmp.ne.s32.totalorder %s110, %s111
    %p123 = scmp.eq.s32.totalorder %s17, 1
    %p124 = por %p122, %p123
    %p126 = scmp.ne.s32.totalorder %s111, %s125
    %p127 = scmp.eq.s32.totalorder %s17, 0
    %p128 = por %p126, %p127
    %s129 = ssub.s32 %s11, %s18
    %p130 = scmp.eq.s32.totalorder %s129, 0
    %s132 = sadd.s32 %s131, 1
    %s133 = scalar_select %p130, %s131, %s132
    %p136 = pneg %p130
    %p137 = scmp.eq.s32.totalorder %s11, 1
    %p138 = por %p136, %p137
    %p139 = scmp.ne.s32.totalorder %s131, %s134
    %p140 = scmp.eq.s32.totalorder %s11, 0
    %p141 = por %p139, %p140
    %p142 = scmp.ne.s32.totalorder %s131, %s134
    %p143 = scmp.eq.s32.totalorder %s16, 1
    %p144 = por %p142, %p143
    %p145 = scmp.ne.s32.totalorder %s134, %s135
    %p146 = scmp.eq.s32.totalorder %s16, 0
    %p147 = por %p145, %p146
    %p148 = scmp.ne.s32.totalorder %s134, %s135
    %p149 = scmp.eq.s32.totalorder %s17, 1
    %p150 = por %p148, %p149
    %p152 = scmp.ne.s32.totalorder %s135, %s151
    %p153 = scmp.eq.s32.totalorder %s17, 0
    %p154 = por %p152, %p153
    %p155 = scmp.le.s32.totalorder 1, %s11
    %p156 = scmp.lt.s32.totalorder %s11, 3
    %p157 = pnand %p155, %p156
    %p158 = pneg %p157
    // Predicated region
    $region9: #{basic_block_forward.1} parent=5 // pred_check
      _
    $region10: #{basic_block_forward.1} parent=5 // pred_check_branch
      %160 = sbr.rel (%p157) target = $region12
    $region11: #{basic_block_forward.1} parent=5 // pred_region
      %s161 = ssub.s32 %s11, 1
      // Predicated region
      $region13: #{basic_block_forward.1} parent=11 // pred_check
        %p162 = pneg %p58
      $region14: #{basic_block_forward.1} parent=11 // pred_check_branch
        %164 = sbr.rel (%p162) target = $region16
      $region15: #{basic_block_forward.1} parent=11 // pred_region
        _
      $region16: #{basic_block_forward.1} parent=11 // pred_fallthru
        _
      // Predicated region
      $region17: #{basic_block_forward.1} parent=11 // pred_check
        %p165 = pneg %p79
      $region18: #{basic_block_forward.1} parent=11 // pred_check_branch
        %167 = sbr.rel (%p165) target = $region20
      $region19: #{basic_block_forward.1} parent=11 // pred_region
        _
      $region20: #{basic_block_forward.1} parent=11 // pred_fallthru
        _
      // Predicated region
      $region21: #{basic_block_forward.1} parent=11 // pred_check
        %p168 = pneg %p100
      $region22: #{basic_block_forward.1} parent=11 // pred_check_branch
        %170 = sbr.rel (%p168) target = $region24
      $region23: #{basic_block_forward.1} parent=11 // pred_region
        _
      $region24: #{basic_block_forward.1} parent=11 // pred_fallthru
        _
      // Predicated region
      $region25: #{basic_block_forward.1} parent=11 // pred_check
        %p171 = pneg %p121
      $region26: #{basic_block_forward.1} parent=11 // pred_check_branch
        %173 = sbr.rel (%p171) target = $region28
      $region27: #{basic_block_forward.1} parent=11 // pred_region
        _
      $region28: #{basic_block_forward.1} parent=11 // pred_fallthru
        _
    $region12: #{basic_block_forward.1} parent=5 // pred_fallthru
      _
    %p174 = scmp.lt.s32.totalorder %s11, 2
    // Predicated region
    $region29: #{basic_block_forward.1} parent=5 // pred_check
      %p175 = pneg %p174
    $region30: #{basic_block_forward.1} parent=5 // pred_check_branch
      %177 = sbr.rel (%p175) target = $region32
    $region31: #{basic_block_forward.1} parent=5 // pred_region
      // Predicated region
      $region33: #{basic_block_forward.1} parent=31 // pred_check
        %p178 = pneg %p31
      $region34: #{basic_block_forward.1} parent=31 // pred_check_branch
        %180 = sbr.rel (%p178) target = $region36
      $region35: #{basic_block_forward.1} parent=31 // pred_region
        %p181 = scmp.lt.s32.totalorder %s11, 1
        %s182 = scalar_select %p181, %s11, 1
        %s183 = smul.addr %s182, 8
        %s184 = smul.addr %s183, 8
        %s185 = scalar_lea.vmem %s0, %s184
      $region36: #{basic_block_forward.1} parent=31 // pred_fallthru
        _
    $region32: #{basic_block_forward.1} parent=5 // pred_fallthru
      _
    %p186 = scmp.le.s32.totalorder 1, %s11
    %p187 = scmp.lt.s32.totalorder %s11, 3
    %p188 = pnand %p186, %p187
    %p189 = pneg %p188
    // Predicated region
    $region37: #{basic_block_forward.1} parent=5 // pred_check
      _
    $region38: #{basic_block_forward.1} parent=5 // pred_check_branch
      %191 = sbr.rel (%p188) target = $region40
    $region39: #{basic_block_forward.1} parent=5 // pred_region
      %s192 = ssub.s32 %s11, 1
      %p193 = scmp.lt.s32.totalorder %s16, 1
      %s194 = scalar_select %p193, %s16, 1
      %s195 = smul.addr %s194, 8
      %s196 = smul.addr %s195, 8
      %s197 = scalar_lea.vmem %s0, %s196
      %p198 = pneg %p37
      %p199 = pneg %p34
      %p200 = pneg %p58
      %p201 = pneg %p55
      %p202 = pneg %p79
      %p203 = pneg %p76
      %p204 = pneg %p100
      %p205 = pneg %p97
      %p206 = pneg %p121
      %p207 = pneg %p118
      %p208 = pneg %p147
      %p209 = pneg %p144
      %p210 = scmp.lt.s32.totalorder %s16, 1
      %s211 = scalar_select %p210, %s16, 1
      %s212 = smul.addr %s211, 8
      %s213 = smul.addr %s212, 8
      %s214 = scalar_lea.vmem %s5, %s213
      %p215 = scmp.lt.s32.totalorder %s16, 1
      %s216 = scalar_select %p215, %s16, 1
      %s217 = smul.addr %s216, 8
      %s218 = smul.addr %s217, 8
      %s219 = scalar_lea.vmem %s0, %s218
      %p220 = scmp.lt.s32.totalorder %s16, 1
      %s221 = scalar_select %p220, %s16, 1
      %s222 = smul.addr %s221, 8
      %s223 = smul.addr %s222, 8
      %s224 = scalar_lea.vmem %s5, %s223
      %v226 = vld [vmem:[%s219] sm:$0xff]
      %v227 = vld [vmem:[%s219 + $0x8] sm:$0xff]
      %v228 = vld [vmem:[%s219 + $0x10] sm:$0xff]
      %v229 = vld [vmem:[%s219 + $0x18] sm:$0xff]
      %v230 = vld [vmem:[%s219 + $0x20] sm:$0xff]
      %v231 = vld [vmem:[%s219 + $0x28] sm:$0xff]
      %v232 = vld [vmem:[%s219 + $0x30] sm:$0xff]
      %v233 = vld [vmem:[%s219 + $0x38] sm:$0xff]
      %v234 = vlaneseq
      %v235 = vshrl.u32 %v234, 7
      %v236 = vadd.s32 %v235, 8
      %v237 = vadd.s32 %v235, 16
      %v238 = vadd.s32 %v235, 24
      %v239 = vadd.s32 %v235, 32
      %v240 = vadd.s32 %v235, 40
      %v241 = vadd.s32 %v235, 48
      %v242 = vadd.s32 %v235, 56
      %v243 = vand.u32 %v235, 15
      %v244 = vand.u32 %v236, 15
      %v245 = vand.u32 %v237, 15
      %v246 = vand.u32 %v238, 15
      %v247 = vand.u32 %v239, 15
      %v248 = vand.u32 %v240, 15
      %v249 = vand.u32 %v241, 15
      %v250 = vand.u32 %v242, 15
      %vm251 = vcmp.ne.s32.totalorder %v243, 0
      %vm252 = vcmp.ne.s32.totalorder %v244, 0
      %vm253 = vcmp.ne.s32.totalorder %v245, 0
      %vm254 = vcmp.ne.s32.totalorder %v246, 0
      %vm255 = vcmp.ne.s32.totalorder %v247, 0
      %vm256 = vcmp.ne.s32.totalorder %v248, 0
      %vm257 = vcmp.ne.s32.totalorder %v249, 0
      %vm258 = vcmp.ne.s32.totalorder %v250, 0
      %vm259 = vcmp.ne.s32.totalorder %v243, 15
      %vm260 = vcmp.ne.s32.totalorder %v244, 15
      %vm261 = vcmp.ne.s32.totalorder %v245, 15
      %vm262 = vcmp.ne.s32.totalorder %v246, 15
      %vm263 = vcmp.ne.s32.totalorder %v247, 15
      %vm264 = vcmp.ne.s32.totalorder %v248, 15
      %vm265 = vcmp.ne.s32.totalorder %v249, 15
      %vm266 = vcmp.ne.s32.totalorder %v250, 15
      %v267 = vrot.slane %v226, 7
      %v268 = vrot.slane %v227, 7
      %v269 = vrot.slane %v228, 7
      %v270 = vrot.slane %v229, 7
      %v271 = vrot.slane %v230, 7
      %v272 = vrot.slane %v231, 7
      %v273 = vrot.slane %v232, 7
      %v274 = vrot.slane %v233, 7
      %vm275 = vcmp.lt.s32.totalorder %v235, 1
      %v276 = vsel %vm275, %v273, %v274
      %v277 = vsel %vm275, %v272, %v273
      %v278 = vsel %vm275, %v271, %v272
      %v279 = vsel %vm275, %v270, %v271
      %v280 = vsel %vm275, %v269, %v270
      %v281 = vsel %vm275, %v268, %v269
      %v282 = vsel %vm275, %v267, %v268
      %v283 = vsel %vm275, %v274, %v267
      %v284 = vsel %vm251, %v283, 0.0
      %v285 = vsel %vm252, %v282, 0.0
      %v286 = vsel %vm253, %v281, 0.0
      %v287 = vsel %vm254, %v280, 0.0
      %v288 = vsel %vm255, %v279, 0.0
      %v289 = vsel %vm256, %v278, 0.0
      %v290 = vsel %vm257, %v277, 0.0
      %v291 = vsel %vm258, %v276, 0.0
      %v292 = vrot.slane %v226, 1
      %v293 = vrot.slane %v227, 1
      %v294 = vrot.slane %v228, 1
      %v295 = vrot.slane %v229, 1
      %v296 = vrot.slane %v230, 1
      %v297 = vrot.slane %v231, 1
      %v298 = vrot.slane %v232, 1
      %v299 = vrot.slane %v233, 1
      %vm300 = vcmp.lt.s32.totalorder %v235, 7
      %v301 = vsel %vm300, %v298, %v299
      %v302 = vsel %vm300, %v297, %v298
      %v303 = vsel %vm300, %v296, %v297
      %v304 = vsel %vm300, %v295, %v296
      %v305 = vsel %vm300, %v294, %v295
      %v306 = vsel %vm300, %v293, %v294
      %v307 = vsel %vm300, %v292, %v293
      %v308 = vsel %vm300, %v299, %v292
      %v309 = vsel %vm259, %v307, 0.0
      %v310 = vsel %vm260, %v306, 0.0
      %v311 = vsel %vm261, %v305, 0.0
      %v312 = vsel %vm262, %v304, 0.0
      %v313 = vsel %vm263, %v303, 0.0
      %v314 = vsel %vm264, %v302, 0.0
      %v315 = vsel %vm265, %v301, 0.0
      %v316 = vsel %vm266, %v308, 0.0
      %v317 = vpack.c.bf16 %v285, %v284
      %v318 = vpack.c.bf16 %v227, %v226
      %v319 = vpack.c.bf16 %v310, %v309
      %v320 = vpack.c.bf16 %v287, %v286
      %v321 = vpack.c.bf16 %v229, %v228
      %v322 = vpack.c.bf16 %v312, %v311
      %v323 = vpack.c.bf16 %v289, %v288
      %v324 = vpack.c.bf16 %v231, %v230
      %v325 = vpack.c.bf16 %v314, %v313
      %v326 = vpack.c.bf16 %v291, %v290
      %v327 = vpack.c.bf16 %v233, %v232
      %v328 = vpack.c.bf16 %v316, %v315
      %v329 = vld [vmem:[%s1] sm:$0xf]
      %v330 = vld [vmem:[%s1 + $0x4] sm:$0xf]
      %v331 = vld [vmem:[%s1 + $0x8] sm:$0xf]
      %v332 = vld [vmem:[%s1 + $0xc] sm:$0xf]
      %v333 = vld [vmem:[%s1 + $0x10] sm:$0xf]
      %v334 = vld [vmem:[%s1 + $0x14] sm:$0xf]
      %v335 = vld [vmem:[%s1 + $0x18] sm:$0xf]
      %v336 = vld [vmem:[%s1 + $0x1c] sm:$0xf]
      %v337 = vld [vmem:[%s1 + $0x20] sm:$0xf]
      %v338 = vld [vmem:[%s1 + $0x24] sm:$0xf]
      %v339 = vld [vmem:[%s1 + $0x28] sm:$0xf]
      %v340 = vld [vmem:[%s1 + $0x2c] sm:$0xf]
      %v341 = vld [vmem:[%s1 + $0x30] sm:$0xf]
      %v342 = vld [vmem:[%s1 + $0x34] sm:$0xf]
      %v343 = vld [vmem:[%s1 + $0x38] sm:$0xf]
      %v344 = vld [vmem:[%s1 + $0x3c] sm:$0xf]
      %v345 = vld [vmem:[%s1 + $0x40] sm:$0xf]
      %v346 = vld [vmem:[%s1 + $0x44] sm:$0xf]
      %v347 = vld [vmem:[%s1 + $0x48] sm:$0xf]
      %v348 = vld [vmem:[%s1 + $0x4c] sm:$0xf]
      %v349 = vld [vmem:[%s1 + $0x50] sm:$0xf]
      %v350 = vld [vmem:[%s1 + $0x54] sm:$0xf]
      %v351 = vld [vmem:[%s1 + $0x58] sm:$0xf]
      %v352 = vld [vmem:[%s1 + $0x5c] sm:$0xf]
      %v353 = vld [vmem:[%s1 + $0x60] sm:$0xf]
      %v354 = vld [vmem:[%s1 + $0x64] sm:$0xf]
      %v355 = vld [vmem:[%s1 + $0x68] sm:$0xf]
      %v356 = vld [vmem:[%s1 + $0x6c] sm:$0xf]
      %v357 = vld [vmem:[%s1 + $0x70] sm:$0xf]
      %v358 = vld [vmem:[%s1 + $0x74] sm:$0xf]
      %v359 = vld [vmem:[%s1 + $0x78] sm:$0xf]
      %v360 = vld [vmem:[%s1 + $0x7c] sm:$0xf]
      %v361 = vld [vmem:[%s1 + $0x80] sm:$0xf]
      %v362 = vld [vmem:[%s1 + $0x84] sm:$0xf]
      %v363 = vld [vmem:[%s1 + $0x88] sm:$0xf]
      %v364 = vld [vmem:[%s1 + $0x8c] sm:$0xf]
      %v365 = vld [vmem:[%s1 + $0x90] sm:$0xf]
      %v366 = vld [vmem:[%s1 + $0x94] sm:$0xf]
      %v367 = vld [vmem:[%s1 + $0x98] sm:$0xf]
      %v368 = vld [vmem:[%s1 + $0x9c] sm:$0xf]
      %v369 = vld [vmem:[%s1 + $0xa0] sm:$0xf]
      %v370 = vld [vmem:[%s1 + $0xa4] sm:$0xf]
      %v371 = vld [vmem:[%s1 + $0xa8] sm:$0xf]
      %v372 = vld [vmem:[%s1 + $0xac] sm:$0xf]
      %v373 = vld [vmem:[%s1 + $0xb0] sm:$0xf]
      %v374 = vld [vmem:[%s1 + $0xb4] sm:$0xf]
      %v375 = vld [vmem:[%s1 + $0xb8] sm:$0xf]
      %v376 = vld [vmem:[%s1 + $0xbc] sm:$0xf]
      %v377 = vld [vmem:[%s2] sm:$0x1]
      %v379 = vlaneseq
      %v380 = vshrl.u32 %v379, 7
      %v381 = vsub.s32 0, %v380
      %v382 = vrot.slane %v377, %v381
      %v432 = vunpack.c.l.b16 %v329
      %v433 = vunpack.c.l.b16 %v330
      %v434 = vunpack.c.l.b16 %v331
      %v435 = vunpack.c.l.b16 %v332
      %v436 = vunpack.c.l.b16 %v333
      %v437 = vunpack.c.l.b16 %v334
      %v438 = vunpack.c.l.b16 %v335
      %v439 = vunpack.c.l.b16 %v336
      %v440 = vunpack.c.l.b16 %v337
      %v441 = vunpack.c.l.b16 %v338
      %v442 = vunpack.c.l.b16 %v339
      %v443 = vunpack.c.l.b16 %v340
      %v444 = vunpack.c.l.b16 %v341
      %v445 = vunpack.c.l.b16 %v342
      %v446 = vunpack.c.l.b16 %v343
      %v447 = vunpack.c.l.b16 %v344
      %v448 = vunpack.c.l.b16 %v345
      %v449 = vunpack.c.l.b16 %v346
      %v450 = vunpack.c.l.b16 %v347
      %v451 = vunpack.c.l.b16 %v348
      %v452 = vunpack.c.l.b16 %v349
      %v453 = vunpack.c.l.b16 %v350
      %v454 = vunpack.c.l.b16 %v351
      %v455 = vunpack.c.l.b16 %v352
      %v456 = vunpack.c.l.b16 %v353
      %v457 = vunpack.c.l.b16 %v354
      %v458 = vunpack.c.l.b16 %v355
      %v459 = vunpack.c.l.b16 %v356
      %v460 = vunpack.c.l.b16 %v357
      %v461 = vunpack.c.l.b16 %v358
      %v462 = vunpack.c.l.b16 %v359
      %v463 = vunpack.c.l.b16 %v360
      %v464 = vunpack.c.l.b16 %v361
      %v465 = vunpack.c.l.b16 %v362
      %v466 = vunpack.c.l.b16 %v363
      %v467 = vunpack.c.l.b16 %v364
      %v468 = vunpack.c.l.b16 %v365
      %v469 = vunpack.c.l.b16 %v366
      %v470 = vunpack.c.l.b16 %v367
      %v471 = vunpack.c.l.b16 %v368
      %v472 = vunpack.c.l.b16 %v369
      %v473 = vunpack.c.l.b16 %v370
      %v474 = vunpack.c.l.b16 %v371
      %v475 = vunpack.c.l.b16 %v372
      %v476 = vunpack.c.l.b16 %v373
      %v477 = vunpack.c.l.b16 %v374
      %v478 = vunpack.c.l.b16 %v375
      %v479 = vunpack.c.l.b16 %v376
      %v480 = vpack.c.b16 %v433, %v432
      %v481 = vpack.c.b16 %v435, %v434
      %v482 = vpack.c.b16 %v437, %v436
      %v483 = vpack.c.b16 %v439, %v438
      %v484 = vpack.c.b16 %v441, %v440
      %v485 = vpack.c.b16 %v443, %v442
      %v486 = vpack.c.b16 %v445, %v444
      %v487 = vpack.c.b16 %v447, %v446
      %v488 = vpack.c.b16 %v449, %v448
      %v489 = vpack.c.b16 %v451, %v450
      %v490 = vpack.c.b16 %v453, %v452
      %v491 = vpack.c.b16 %v455, %v454
      %v492 = vpack.c.b16 %v457, %v456
      %v493 = vpack.c.b16 %v459, %v458
      %v494 = vpack.c.b16 %v461, %v460
      %v495 = vpack.c.b16 %v463, %v462
      %v496 = vpack.c.b16 %v465, %v464
      %v497 = vpack.c.b16 %v467, %v466
      %v498 = vpack.c.b16 %v469, %v468
      %v499 = vpack.c.b16 %v471, %v470
      %v500 = vpack.c.b16 %v473, %v472
      %v501 = vpack.c.b16 %v475, %v474
      %v502 = vpack.c.b16 %v477, %v476
      %v503 = vpack.c.b16 %v479, %v478
      %528 = vmatprep.subr.bf16.mxu0 0
      %529 = vmatpush1.bf16.msra.mxu0 %v487
      %530 = vmatprep.subr.bf16.mxu0 0
      %531 = vmatpush1.bf16.msra.mxu0 %v486
      %532 = vmatprep.subr.bf16.mxu0 0
      %533 = vmatpush1.bf16.msra.mxu0 %v485
      %534 = vmatprep.subr.bf16.mxu0 0
      %535 = vmatpush1.bf16.msra.mxu0 %v484
      %536 = vmatprep.subr.bf16.mxu0 0
      %537 = vmatpush1.bf16.msra.mxu0 %v483
      %538 = vmatprep.subr.bf16.mxu0 0
      %539 = vmatpush1.bf16.msra.mxu0 %v482
      %540 = vmatprep.subr.bf16.mxu0 0
      %541 = vmatpush1.bf16.msra.mxu0 %v481
      %542 = vmatprep.subr.bf16.mxu0 0
      %543 = vmatpush1.bf16.msra.mxu0 %v480
      %544 = vmatprep.subr.bf16.mxu0 0
      %545 = vmatpush2.bf16.msra.mxu0 %v495
      %546 = vmatprep.subr.bf16.mxu0 0
      %547 = vmatpush2.bf16.msra.mxu0 %v494
      %548 = vmatprep.subr.bf16.mxu0 0
      %549 = vmatpush2.bf16.msra.mxu0 %v493
      %550 = vmatprep.subr.bf16.mxu0 0
      %551 = vmatpush2.bf16.msra.mxu0 %v492
      %552 = vmatprep.subr.bf16.mxu0 0
      %553 = vmatpush2.bf16.msra.mxu0 %v491
      %554 = vmatprep.subr.bf16.mxu0 0
      %555 = vmatpush2.bf16.msra.mxu0 %v490
      %556 = vmatprep.subr.bf16.mxu0 0
      %557 = vmatpush2.bf16.msra.mxu0 %v489
      %558 = vmatprep.subr.bf16.mxu0 0
      %559 = vmatpush2.bf16.msra.mxu0 %v488
      %560 = vmatprep.mubr.bf16.mxu0 %v318
      %561 = vmatmul.mubr.bf16.gmra.mxu0 %v317
      %v562 = vpop.f32.mrf.mxu0
      %v563 = vadd.f32 %v382, %v562
      %v564 = vpop.f32.mrf.mxu0
      %v565 = vpop.f32.mrf.mxu0
      %v566 = vadd.f32 %v382, %v565
      %v567 = vpop.f32.mrf.mxu0
      %568 = vmatprep.mubr.bf16.mxu0 %v321
      %569 = vmatmul.mubr.bf16.gmra.mxu0 %v320
      %v570 = vpop.f32.mrf.mxu0
      %v571 = vadd.f32 %v382, %v570
      %v572 = vpop.f32.mrf.mxu0
      %v573 = vpop.f32.mrf.mxu0
      %v574 = vadd.f32 %v382, %v573
      %v575 = vpop.f32.mrf.mxu0
      %576 = vmatprep.mubr.bf16.mxu0 %v324
      %577 = vmatmul.mubr.bf16.gmra.mxu0 %v323
      %v578 = vpop.f32.mrf.mxu0
      %v579 = vadd.f32 %v382, %v578
      %v580 = vpop.f32.mrf.mxu0
      %v581 = vpop.f32.mrf.mxu0
      %v582 = vadd.f32 %v382, %v581
      %v583 = vpop.f32.mrf.mxu0
      %584 = vmatprep.mubr.bf16.mxu0 %v327
      %585 = vmatmul.mubr.bf16.gmra.mxu0 %v326
      %v586 = vpop.f32.mrf.mxu0
      %v587 = vadd.f32 %v382, %v586
      %v588 = vpop.f32.mrf.mxu0
      %v589 = vpop.f32.mrf.mxu0
      %v590 = vadd.f32 %v382, %v589
      %v591 = vpop.f32.mrf.mxu0
      %592 = vdwg.mxu0
      %593 = vmatprep.subr.bf16.mxu0 0
      %594 = vmatpush1.bf16.msra.mxu0 %v503
      %595 = vmatprep.subr.bf16.mxu0 0
      %596 = vmatpush1.bf16.msra.mxu0 %v502
      %597 = vmatprep.subr.bf16.mxu0 0
      %598 = vmatpush1.bf16.msra.mxu0 %v501
      %599 = vmatprep.subr.bf16.mxu0 0
      %600 = vmatpush1.bf16.msra.mxu0 %v500
      %601 = vmatprep.subr.bf16.mxu0 0
      %602 = vmatpush1.bf16.msra.mxu0 %v499
      %603 = vmatprep.subr.bf16.mxu0 0
      %604 = vmatpush1.bf16.msra.mxu0 %v498
      %605 = vmatprep.subr.bf16.mxu0 0
      %606 = vmatpush1.bf16.msra.mxu0 %v497
      %607 = vmatprep.subr.bf16.mxu0 0
      %608 = vmatpush1.bf16.msra.mxu0 %v496
      %609 = vmatprep.subr.bf16.mxu0 0
      %610 = vmatpush2.bf16.msra.mxu0 0
      %611 = vmatprep.subr.bf16.mxu0 0
      %612 = vmatpush2.bf16.msra.mxu0 0
      %613 = vmatprep.subr.bf16.mxu0 0
      %614 = vmatpush2.bf16.msra.mxu0 0
      %615 = vmatprep.subr.bf16.mxu0 0
      %616 = vmatpush2.bf16.msra.mxu0 0
      %617 = vmatprep.subr.bf16.mxu0 0
      %618 = vmatpush2.bf16.msra.mxu0 0
      %619 = vmatprep.subr.bf16.mxu0 0
      %620 = vmatpush2.bf16.msra.mxu0 0
      %621 = vmatprep.subr.bf16.mxu0 0
      %622 = vmatpush2.bf16.msra.mxu0 0
      %623 = vmatprep.subr.bf16.mxu0 0
      %624 = vmatpush2.bf16.msra.mxu0 0
      %625 = vmatprep.mubr.bf16.mxu0 0
      %626 = vmatmul.mubr.bf16.gmra.mxu0 %v319
      %v627 = vpop.f32.mrf.mxu0
      %v628 = vadd.f32 %v563, %v627
      %v629 = vpop.f32.mrf.mxu0
      %v630 = vpop.f32.mrf.mxu0
      %v631 = vadd.f32 %v566, %v630
      %v632 = vpop.f32.mrf.mxu0
      %633 = vmatprep.mubr.bf16.mxu0 0
      %634 = vmatmul.mubr.bf16.gmra.mxu0 %v322
      %v635 = vpop.f32.mrf.mxu0
      %v636 = vadd.f32 %v571, %v635
      %v637 = vpop.f32.mrf.mxu0
      %v638 = vpop.f32.mrf.mxu0
      %v639 = vadd.f32 %v574, %v638
      %v640 = vpop.f32.mrf.mxu0
      %641 = vmatprep.mubr.bf16.mxu0 0
      %642 = vmatmul.mubr.bf16.gmra.mxu0 %v325
      %v643 = vpop.f32.mrf.mxu0
      %v644 = vadd.f32 %v579, %v643
      %v645 = vpop.f32.mrf.mxu0
      %v646 = vpop.f32.mrf.mxu0
      %v647 = vadd.f32 %v582, %v646
      %v648 = vpop.f32.mrf.mxu0
      %649 = vmatprep.mubr.bf16.mxu0 0
      %650 = vmatmul.mubr.bf16.gmra.mxu0 %v328
      %v651 = vpop.f32.mrf.mxu0
      %v652 = vadd.f32 %v587, %v651
      %v653 = vpop.f32.mrf.mxu0
      %v654 = vpop.f32.mrf.mxu0
      %v655 = vadd.f32 %v590, %v654
      %v656 = vpop.f32.mrf.mxu0
      %657 = vdwg.mxu0
      %v658 = vadd.f32 %v628, 0.0
      %v659 = vadd.f32 %v631, 0.0
      %vm660 = vcmp.ge.f32.partialorder %v658, 1.0
      %vm661 = vcmp.ge.f32.partialorder %v659, 1.0
      %v662 = vsel %vm660, 1, 0
      %v663 = vsel %vm661, 1, 0
      %v664 = vcvt.s32.f32 %v662
      %v665 = vcvt.s32.f32 %v663
      %v666 = vsel %vm660, 0.0, %v658
      %v667 = vsel %vm661, 0.0, %v659
      %v668 = vadd.f32 %v666, %v636
      %v669 = vadd.f32 %v667, %v639
      %vm670 = vcmp.ge.f32.partialorder %v668, 1.0
      %vm671 = vcmp.ge.f32.partialorder %v669, 1.0
      %v672 = vsel %vm670, 1, 0
      %v673 = vsel %vm671, 1, 0
      %v674 = vcvt.s32.f32 %v672
      %v675 = vcvt.s32.f32 %v673
      %v676 = vsel %vm670, 0.0, %v668
      %v677 = vsel %vm671, 0.0, %v669
      %v678 = vadd.f32 %v676, %v644
      %v679 = vadd.f32 %v677, %v647
      %vm680 = vcmp.ge.f32.partialorder %v678, 1.0
      %vm681 = vcmp.ge.f32.partialorder %v679, 1.0
      %v682 = vsel %vm680, 1, 0
      %v683 = vsel %vm681, 1, 0
      %v684 = vcvt.s32.f32 %v682
      %v685 = vcvt.s32.f32 %v683
      %v686 = vsel %vm680, 0.0, %v678
      %v687 = vsel %vm681, 0.0, %v679
      %v688 = vadd.f32 %v686, %v652
      %v689 = vadd.f32 %v687, %v655
      %vm690 = vcmp.ge.f32.partialorder %v688, 1.0
      %vm691 = vcmp.ge.f32.partialorder %v689, 1.0
      %v692 = vsel %vm690, 1, 0
      %v693 = vsel %vm691, 1, 0
      %v694 = vcvt.s32.f32 %v692
      %v695 = vcvt.s32.f32 %v693
      %v696 = vrot.slane %v664, 7
      %v697 = vrot.slane %v665, 7
      %v698 = vrot.slane %v674, 7
      %v699 = vrot.slane %v675, 7
      %v700 = vrot.slane %v684, 7
      %v701 = vrot.slane %v685, 7
      %v702 = vrot.slane %v694, 7
      %v703 = vrot.slane %v695, 7
      %v704 = vsel %vm275, %v702, %v703
      %v705 = vsel %vm275, %v701, %v702
      %v706 = vsel %vm275, %v700, %v701
      %v707 = vsel %vm275, %v699, %v700
      %v708 = vsel %vm275, %v698, %v699
      %v709 = vsel %vm275, %v697, %v698
      %v710 = vsel %vm275, %v696, %v697
      %v711 = vsel %vm275, %v703, %v696
      %v712 = vsel %vm251, %v711, 0.0
      %v713 = vsel %vm252, %v710, 0.0
      %v714 = vsel %vm253, %v709, 0.0
      %v715 = vsel %vm254, %v708, 0.0
      %v716 = vsel %vm255, %v707, 0.0
      %v717 = vsel %vm256, %v706, 0.0
      %v718 = vsel %vm257, %v705, 0.0
      %v719 = vsel %vm258, %v704, 0.0
      %v720 = vrot.slane %v664, 1
      %v721 = vrot.slane %v665, 1
      %v722 = vrot.slane %v674, 1
      %v723 = vrot.slane %v675, 1
      %v724 = vrot.slane %v684, 1
      %v725 = vrot.slane %v685, 1
      %v726 = vrot.slane %v694, 1
      %v727 = vrot.slane %v695, 1
      %v728 = vsel %vm300, %v726, %v727
      %v729 = vsel %vm300, %v725, %v726
      %v730 = vsel %vm300, %v724, %v725
      %v731 = vsel %vm300, %v723, %v724
      %v732 = vsel %vm300, %v722, %v723
      %v733 = vsel %vm300, %v721, %v722
      %v734 = vsel %vm300, %v720, %v721
      %v735 = vsel %vm300, %v727, %v720
      %v736 = vsel %vm259, %v734, 0.0
      %v737 = vsel %vm260, %v733, 0.0
      %v738 = vsel %vm261, %v732, 0.0
      %v739 = vsel %vm262, %v731, 0.0
      %v740 = vsel %vm263, %v730, 0.0
      %v741 = vsel %vm264, %v729, 0.0
      %v742 = vsel %vm265, %v728, 0.0
      %v743 = vsel %vm266, %v735, 0.0
      %v744 = vpack.c.bf16 %v713, %v712
      %v745 = vpack.c.bf16 %v665, %v664
      %v746 = vpack.c.bf16 %v737, %v736
      %v747 = vpack.c.bf16 %v715, %v714
      %v748 = vpack.c.bf16 %v675, %v674
      %v749 = vpack.c.bf16 %v739, %v738
      %v750 = vpack.c.bf16 %v717, %v716
      %v751 = vpack.c.bf16 %v685, %v684
      %v752 = vpack.c.bf16 %v741, %v740
      %v753 = vpack.c.bf16 %v719, %v718
      %v754 = vpack.c.bf16 %v695, %v694
      %v755 = vpack.c.bf16 %v743, %v742
      %v756 = vld [vmem:[%s3] sm:$0xf]
      %v757 = vld [vmem:[%s3 + $0x4] sm:$0xf]
      %v758 = vld [vmem:[%s3 + $0x8] sm:$0xf]
      %v759 = vld [vmem:[%s3 + $0xc] sm:$0xf]
      %v760 = vld [vmem:[%s3 + $0x10] sm:$0xf]
      %v761 = vld [vmem:[%s3 + $0x14] sm:$0xf]
      %v762 = vld [vmem:[%s3 + $0x18] sm:$0xf]
      %v763 = vld [vmem:[%s3 + $0x1c] sm:$0xf]
      %v764 = vld [vmem:[%s3 + $0x20] sm:$0xf]
      %v765 = vld [vmem:[%s3 + $0x24] sm:$0xf]
      %v766 = vld [vmem:[%s3 + $0x28] sm:$0xf]
      %v767 = vld [vmem:[%s3 + $0x2c] sm:$0xf]
      %v768 = vld [vmem:[%s3 + $0x30] sm:$0xf]
      %v769 = vld [vmem:[%s3 + $0x34] sm:$0xf]
      %v770 = vld [vmem:[%s3 + $0x38] sm:$0xf]
      %v771 = vld [vmem:[%s3 + $0x3c] sm:$0xf]
      %v772 = vld [vmem:[%s3 + $0x40] sm:$0xf]
      %v773 = vld [vmem:[%s3 + $0x44] sm:$0xf]
      %v774 = vld [vmem:[%s3 + $0x48] sm:$0xf]
      %v775 = vld [vmem:[%s3 + $0x4c] sm:$0xf]
      %v776 = vld [vmem:[%s3 + $0x50] sm:$0xf]
      %v777 = vld [vmem:[%s3 + $0x54] sm:$0xf]
      %v778 = vld [vmem:[%s3 + $0x58] sm:$0xf]
      %v779 = vld [vmem:[%s3 + $0x5c] sm:$0xf]
      %v780 = vld [vmem:[%s3 + $0x60] sm:$0xf]
      %v781 = vld [vmem:[%s3 + $0x64] sm:$0xf]
      %v782 = vld [vmem:[%s3 + $0x68] sm:$0xf]
      %v783 = vld [vmem:[%s3 + $0x6c] sm:$0xf]
      %v784 = vld [vmem:[%s3 + $0x70] sm:$0xf]
      %v785 = vld [vmem:[%s3 + $0x74] sm:$0xf]
      %v786 = vld [vmem:[%s3 + $0x78] sm:$0xf]
      %v787 = vld [vmem:[%s3 + $0x7c] sm:$0xf]
      %v788 = vld [vmem:[%s3 + $0x80] sm:$0xf]
      %v789 = vld [vmem:[%s3 + $0x84] sm:$0xf]
      %v790 = vld [vmem:[%s3 + $0x88] sm:$0xf]
      %v791 = vld [vmem:[%s3 + $0x8c] sm:$0xf]
      %v792 = vld [vmem:[%s3 + $0x90] sm:$0xf]
      %v793 = vld [vmem:[%s3 + $0x94] sm:$0xf]
      %v794 = vld [vmem:[%s3 + $0x98] sm:$0xf]
      %v795 = vld [vmem:[%s3 + $0x9c] sm:$0xf]
      %v796 = vld [vmem:[%s3 + $0xa0] sm:$0xf]
      %v797 = vld [vmem:[%s3 + $0xa4] sm:$0xf]
      %v798 = vld [vmem:[%s3 + $0xa8] sm:$0xf]
      %v799 = vld [vmem:[%s3 + $0xac] sm:$0xf]
      %v800 = vld [vmem:[%s3 + $0xb0] sm:$0xf]
      %v801 = vld [vmem:[%s3 + $0xb4] sm:$0xf]
      %v802 = vld [vmem:[%s3 + $0xb8] sm:$0xf]
      %v803 = vld [vmem:[%s3 + $0xbc] sm:$0xf]
      %v804 = vld [vmem:[%s4] sm:$0x1]
      %v806 = vlaneseq
      %v807 = vshrl.u32 %v806, 7
      %v808 = vsub.s32 0, %v807
      %v809 = vrot.slane %v804, %v808
      %v859 = vunpack.c.l.b16 %v756
      %v860 = vunpack.c.l.b16 %v757
      %v861 = vunpack.c.l.b16 %v758
      %v862 = vunpack.c.l.b16 %v759
      %v863 = vunpack.c.l.b16 %v760
      %v864 = vunpack.c.l.b16 %v761
      %v865 = vunpack.c.l.b16 %v762
      %v866 = vunpack.c.l.b16 %v763
      %v867 = vunpack.c.l.b16 %v764
      %v868 = vunpack.c.l.b16 %v765
      %v869 = vunpack.c.l.b16 %v766
      %v870 = vunpack.c.l.b16 %v767
      %v871 = vunpack.c.l.b16 %v768
      %v872 = vunpack.c.l.b16 %v769
      %v873 = vunpack.c.l.b16 %v770
      %v874 = vunpack.c.l.b16 %v771
      %v875 = vunpack.c.l.b16 %v772
      %v876 = vunpack.c.l.b16 %v773
      %v877 = vunpack.c.l.b16 %v774
      %v878 = vunpack.c.l.b16 %v775
      %v879 = vunpack.c.l.b16 %v776
      %v880 = vunpack.c.l.b16 %v777
      %v881 = vunpack.c.l.b16 %v778
      %v882 = vunpack.c.l.b16 %v779
      %v883 = vunpack.c.l.b16 %v780
      %v884 = vunpack.c.l.b16 %v781
      %v885 = vunpack.c.l.b16 %v782
      %v886 = vunpack.c.l.b16 %v783
      %v887 = vunpack.c.l.b16 %v784
      %v888 = vunpack.c.l.b16 %v785
      %v889 = vunpack.c.l.b16 %v786
      %v890 = vunpack.c.l.b16 %v787
      %v891 = vunpack.c.l.b16 %v788
      %v892 = vunpack.c.l.b16 %v789
      %v893 = vunpack.c.l.b16 %v790
      %v894 = vunpack.c.l.b16 %v791
      %v895 = vunpack.c.l.b16 %v792
      %v896 = vunpack.c.l.b16 %v793
      %v897 = vunpack.c.l.b16 %v794
      %v898 = vunpack.c.l.b16 %v795
      %v899 = vunpack.c.l.b16 %v796
      %v900 = vunpack.c.l.b16 %v797
      %v901 = vunpack.c.l.b16 %v798
      %v902 = vunpack.c.l.b16 %v799
      %v903 = vunpack.c.l.b16 %v800
      %v904 = vunpack.c.l.b16 %v801
      %v905 = vunpack.c.l.b16 %v802
      %v906 = vunpack.c.l.b16 %v803
      %v907 = vpack.c.b16 %v860, %v859
      %v908 = vpack.c.b16 %v862, %v861
      %v909 = vpack.c.b16 %v864, %v863
      %v910 = vpack.c.b16 %v866, %v865
      %v911 = vpack.c.b16 %v868, %v867
      %v912 = vpack.c.b16 %v870, %v869
      %v913 = vpack.c.b16 %v872, %v871
      %v914 = vpack.c.b16 %v874, %v873
      %v915 = vpack.c.b16 %v876, %v875
      %v916 = vpack.c.b16 %v878, %v877
      %v917 = vpack.c.b16 %v880, %v879
      %v918 = vpack.c.b16 %v882, %v881
      %v919 = vpack.c.b16 %v884, %v883
      %v920 = vpack.c.b16 %v886, %v885
      %v921 = vpack.c.b16 %v888, %v887
      %v922 = vpack.c.b16 %v890, %v889
      %v923 = vpack.c.b16 %v892, %v891
      %v924 = vpack.c.b16 %v894, %v893
      %v925 = vpack.c.b16 %v896, %v895
      %v926 = vpack.c.b16 %v898, %v897
      %v927 = vpack.c.b16 %v900, %v899
      %v928 = vpack.c.b16 %v902, %v901
      %v929 = vpack.c.b16 %v904, %v903
      %v930 = vpack.c.b16 %v906, %v905
      %955 = vmatprep.subr.bf16.mxu0 0
      %956 = vmatpush1.bf16.msra.mxu0 %v914
      %957 = vmatprep.subr.bf16.mxu0 0
      %958 = vmatpush1.bf16.msra.mxu0 %v913
      %959 = vmatprep.subr.bf16.mxu0 0
      %960 = vmatpush1.bf16.msra.mxu0 %v912
      %961 = vmatprep.subr.bf16.mxu0 0
      %962 = vmatpush1.bf16.msra.mxu0 %v911
      %963 = vmatprep.subr.bf16.mxu0 0
      %964 = vmatpush1.bf16.msra.mxu0 %v910
      %965 = vmatprep.subr.bf16.mxu0 0
      %966 = vmatpush1.bf16.msra.mxu0 %v909
      %967 = vmatprep.subr.bf16.mxu0 0
      %968 = vmatpush1.bf16.msra.mxu0 %v908
      %969 = vmatprep.subr.bf16.mxu0 0
      %970 = vmatpush1.bf16.msra.mxu0 %v907
      %971 = vmatprep.subr.bf16.mxu0 0
      %972 = vmatpush2.bf16.msra.mxu0 %v922
      %973 = vmatprep.subr.bf16.mxu0 0
      %974 = vmatpush2.bf16.msra.mxu0 %v921
      %975 = vmatprep.subr.bf16.mxu0 0
      %976 = vmatpush2.bf16.msra.mxu0 %v920
      %977 = vmatprep.subr.bf16.mxu0 0
      %978 = vmatpush2.bf16.msra.mxu0 %v919
      %979 = vmatprep.subr.bf16.mxu0 0
      %980 = vmatpush2.bf16.msra.mxu0 %v918
      %981 = vmatprep.subr.bf16.mxu0 0
      %982 = vmatpush2.bf16.msra.mxu0 %v917
      %983 = vmatprep.subr.bf16.mxu0 0
      %984 = vmatpush2.bf16.msra.mxu0 %v916
      %985 = vmatprep.subr.bf16.mxu0 0
      %986 = vmatpush2.bf16.msra.mxu0 %v915
      %987 = vmatprep.mubr.bf16.mxu0 %v745
      %988 = vmatmul.mubr.bf16.gmra.mxu0 %v744
      %v989 = vpop.f32.mrf.mxu0
      %v990 = vadd.f32 %v809, %v989
      %v991 = vpop.f32.mrf.mxu0
      %v992 = vpop.f32.mrf.mxu0
      %v993 = vadd.f32 %v809, %v992
      %v994 = vpop.f32.mrf.mxu0
      %995 = vmatprep.mubr.bf16.mxu0 %v748
      %996 = vmatmul.mubr.bf16.gmra.mxu0 %v747
      %v997 = vpop.f32.mrf.mxu0
      %v998 = vadd.f32 %v809, %v997
      %v999 = vpop.f32.mrf.mxu0
      %v1000 = vpop.f32.mrf.mxu0
      %v1001 = vadd.f32 %v809, %v1000
      %v1002 = vpop.f32.mrf.mxu0
      %1003 = vmatprep.mubr.bf16.mxu0 %v751
      %1004 = vmatmul.mubr.bf16.gmra.mxu0 %v750
      %v1005 = vpop.f32.mrf.mxu0
      %v1006 = vadd.f32 %v809, %v1005
      %v1007 = vpop.f32.mrf.mxu0
      %v1008 = vpop.f32.mrf.mxu0
      %v1009 = vadd.f32 %v809, %v1008
      %v1010 = vpop.f32.mrf.mxu0
      %1011 = vmatprep.mubr.bf16.mxu0 %v754
      %1012 = vmatmul.mubr.bf16.gmra.mxu0 %v753
      %v1013 = vpop.f32.mrf.mxu0
      %v1014 = vadd.f32 %v809, %v1013
      %v1015 = vpop.f32.mrf.mxu0
      %v1016 = vpop.f32.mrf.mxu0
      %v1017 = vadd.f32 %v809, %v1016
      %v1018 = vpop.f32.mrf.mxu0
      %1019 = vdwg.mxu0
      %1020 = vmatprep.subr.bf16.mxu0 0
      %1021 = vmatpush1.bf16.msra.mxu0 %v930
      %1022 = vmatprep.subr.bf16.mxu0 0
      %1023 = vmatpush1.bf16.msra.mxu0 %v929
      %1024 = vmatprep.subr.bf16.mxu0 0
      %1025 = vmatpush1.bf16.msra.mxu0 %v928
      %1026 = vmatprep.subr.bf16.mxu0 0
      %1027 = vmatpush1.bf16.msra.mxu0 %v927
      %1028 = vmatprep.subr.bf16.mxu0 0
      %1029 = vmatpush1.bf16.msra.mxu0 %v926
      %1030 = vmatprep.subr.bf16.mxu0 0
      %1031 = vmatpush1.bf16.msra.mxu0 %v925
      %1032 = vmatprep.subr.bf16.mxu0 0
      %1033 = vmatpush1.bf16.msra.mxu0 %v924
      %1034 = vmatprep.subr.bf16.mxu0 0
      %1035 = vmatpush1.bf16.msra.mxu0 %v923
      %1036 = vmatprep.subr.bf16.mxu0 0
      %1037 = vmatpush2.bf16.msra.mxu0 0
      %1038 = vmatprep.subr.bf16.mxu0 0
      %1039 = vmatpush2.bf16.msra.mxu0 0
      %1040 = vmatprep.subr.bf16.mxu0 0
      %1041 = vmatpush2.bf16.msra.mxu0 0
      %1042 = vmatprep.subr.bf16.mxu0 0
      %1043 = vmatpush2.bf16.msra.mxu0 0
      %1044 = vmatprep.subr.bf16.mxu0 0
      %1045 = vmatpush2.bf16.msra.mxu0 0
      %1046 = vmatprep.subr.bf16.mxu0 0
      %1047 = vmatpush2.bf16.msra.mxu0 0
      %1048 = vmatprep.subr.bf16.mxu0 0
      %1049 = vmatpush2.bf16.msra.mxu0 0
      %1050 = vmatprep.subr.bf16.mxu0 0
      %1051 = vmatpush2.bf16.msra.mxu0 0
      %1052 = vmatprep.mubr.bf16.mxu0 0
      %1053 = vmatmul.mubr.bf16.gmra.mxu0 %v746
      %v1054 = vpop.f32.mrf.mxu0
      %v1055 = vadd.f32 %v990, %v1054
      %v1056 = vpop.f32.mrf.mxu0
      %v1057 = vpop.f32.mrf.mxu0
      %v1058 = vadd.f32 %v993, %v1057
      %v1059 = vpop.f32.mrf.mxu0
      %1060 = vmatprep.mubr.bf16.mxu0 0
      %1061 = vmatmul.mubr.bf16.gmra.mxu0 %v749
      %v1062 = vpop.f32.mrf.mxu0
      %v1063 = vadd.f32 %v998, %v1062
      %v1064 = vpop.f32.mrf.mxu0
      %v1065 = vpop.f32.mrf.mxu0
      %v1066 = vadd.f32 %v1001, %v1065
      %v1067 = vpop.f32.mrf.mxu0
      %1068 = vmatprep.mubr.bf16.mxu0 0
      %1069 = vmatmul.mubr.bf16.gmra.mxu0 %v752
      %v1070 = vpop.f32.mrf.mxu0
      %v1071 = vadd.f32 %v1006, %v1070
      %v1072 = vpop.f32.mrf.mxu0
      %v1073 = vpop.f32.mrf.mxu0
      %v1074 = vadd.f32 %v1009, %v1073
      %v1075 = vpop.f32.mrf.mxu0
      %1076 = vmatprep.mubr.bf16.mxu0 0
      %1077 = vmatmul.mubr.bf16.gmra.mxu0 %v755
      %v1078 = vpop.f32.mrf.mxu0
      %v1079 = vadd.f32 %v1014, %v1078
      %v1080 = vpop.f32.mrf.mxu0
      %v1081 = vpop.f32.mrf.mxu0
      %v1082 = vadd.f32 %v1017, %v1081
      %v1083 = vpop.f32.mrf.mxu0
      %1084 = vdwg.mxu0
      %v1085 = vadd.f32 %v1055, 0.0
      %v1086 = vadd.f32 %v1058, 0.0
      %vm1087 = vcmp.ge.f32.partialorder %v1085, 1.0
      %vm1088 = vcmp.ge.f32.partialorder %v1086, 1.0
      %v1089 = vsel %vm1087, 1, 0
      %v1090 = vsel %vm1088, 1, 0
      %v1091 = vcvt.s32.f32 %v1089
      %v1092 = vcvt.s32.f32 %v1090
      %v1093 = vsel %vm1087, 0.0, %v1085
      %v1094 = vsel %vm1088, 0.0, %v1086
      %v1095 = vadd.f32 %v1093, %v1063
      %v1096 = vadd.f32 %v1094, %v1066
      %vm1097 = vcmp.ge.f32.partialorder %v1095, 1.0
      %vm1098 = vcmp.ge.f32.partialorder %v1096, 1.0
      %v1099 = vsel %vm1097, 1, 0
      %v1100 = vsel %vm1098, 1, 0
      %v1101 = vcvt.s32.f32 %v1099
      %v1102 = vcvt.s32.f32 %v1100
      %v1103 = vsel %vm1097, 0.0, %v1095
      %v1104 = vsel %vm1098, 0.0, %v1096
      %v1105 = vadd.f32 %v1103, %v1071
      %v1106 = vadd.f32 %v1104, %v1074
      %vm1107 = vcmp.ge.f32.partialorder %v1105, 1.0
      %vm1108 = vcmp.ge.f32.partialorder %v1106, 1.0
      %v1109 = vsel %vm1107, 1, 0
      %v1110 = vsel %vm1108, 1, 0
      %v1111 = vcvt.s32.f32 %v1109
      %v1112 = vcvt.s32.f32 %v1110
      %v1113 = vsel %vm1107, 0.0, %v1105
      %v1114 = vsel %vm1108, 0.0, %v1106
      %v1115 = vadd.f32 %v1113, %v1079
      %v1116 = vadd.f32 %v1114, %v1082
      %vm1117 = vcmp.ge.f32.partialorder %v1115, 1.0
      %vm1118 = vcmp.ge.f32.partialorder %v1116, 1.0
      %v1119 = vsel %vm1117, 1, 0
      %v1120 = vsel %vm1118, 1, 0
      %v1121 = vcvt.s32.f32 %v1119
      %v1122 = vcvt.s32.f32 %v1120
      %v1123 = vadd.f32 %v1091, %v226
      %v1124 = vadd.f32 %v1092, %v227
      %v1125 = vadd.f32 %v1101, %v228
      %v1126 = vadd.f32 %v1102, %v229
      %v1127 = vadd.f32 %v1111, %v230
      %v1128 = vadd.f32 %v1112, %v231
      %v1129 = vadd.f32 %v1121, %v232
      %v1130 = vadd.f32 %v1122, %v233
      %1131 = vst [vmem:[%s224] sm:$0xff] %v1123
      %1132 = vst [vmem:[%s224 + $0x8] sm:$0xff] %v1124
      %1133 = vst [vmem:[%s224 + $0x10] sm:$0xff] %v1125
      %1134 = vst [vmem:[%s224 + $0x18] sm:$0xff] %v1126
      %1135 = vst [vmem:[%s224 + $0x20] sm:$0xff] %v1127
      %1136 = vst [vmem:[%s224 + $0x28] sm:$0xff] %v1128
      %1137 = vst [vmem:[%s224 + $0x30] sm:$0xff] %v1129
      %1138 = vst [vmem:[%s224 + $0x38] sm:$0xff] %v1130
      %p1139 = scmp.lt.s32.totalorder %s16, 1
      %s1140 = scalar_select %p1139, %s16, 1
      %s1141 = smul.addr %s1140, 8
      %s1142 = smul.addr %s1141, 8
      %s1143 = scalar_lea.vmem %s5, %s1142
      // Predicated region
      $region41: #{basic_block_forward.1} parent=39 // pred_check
        %p1144 = pneg %p144
      $region42: #{basic_block_forward.1} parent=39 // pred_check_branch
        %1146 = sbr.rel (%p1144) target = $region44
      $region43: #{basic_block_forward.1} parent=39 // pred_region
        _
      $region44: #{basic_block_forward.1} parent=39 // pred_fallthru
        _
    $region40: #{basic_block_forward.1} parent=5 // pred_fallthru
      _
    %p1147 = scmp.le.s32.totalorder 2, %s11
    // Predicated region
    $region45: #{basic_block_forward.1} parent=5 // pred_check
      %p1148 = pneg %p1147
    $region46: #{basic_block_forward.1} parent=5 // pred_check_branch
      %1150 = sbr.rel (%p1148) target = $region48
    $region47: #{basic_block_forward.1} parent=5 // pred_region
      %s1151 = ssub.s32 %s11, 2
      // Predicated region
      $region49: #{basic_block_forward.1} parent=47 // pred_check
        %p1152 = pneg %p150
      $region50: #{basic_block_forward.1} parent=47 // pred_check_branch
        %1154 = sbr.rel (%p1152) target = $region52
      $region51: #{basic_block_forward.1} parent=47 // pred_region
        %p1155 = scmp.lt.s32.totalorder %s17, 1
        %s1156 = scalar_select %p1155, %s17, 1
        %s1157 = smul.addr %s1156, 8
        %s1158 = smul.addr %s1157, 8
        %s1159 = scalar_lea.vmem %s5, %s1158
      $region52: #{basic_block_forward.1} parent=47 // pred_fallthru
        _
    $region48: #{basic_block_forward.1} parent=5 // pred_fallthru
      _
  $region6: #{basic_block_forward.1} parent=0 // loop_footer
    %s15 = sadd.s32 1, %s11
  $region7: #{basic_block_forward.1} parent=0 // loop_footer_branch
    %10 = sbr.rel target = $region3
  $region8: #{basic_block_forward.1} parent=0 // loop_exit
    _

</llo_original>
